<compile_context>
chip_gen: v5e
topology: v5e:2x2
jax: 0.10.0
libtpu: 0.0.40
codegen_flags: <defaults>
</compile_context>

<pallas_src>
import jax
import jax.numpy as jnp
from jax.experimental import pallas as pl
from jax.experimental.pallas import tpu as pltpu

LANE = 128
ROWS = 16  # batch-tile row alignment (bf16 packs 16 rows per sublane group)


def _sigmoid(h):
    # Single EUP op (tanh); mul/add go to the VALU which has slack in this kernel.
    return 0.5 * jnp.tanh(0.5 * h) + 0.5


def mlp_kernel(x_ref, w1_ref, b1_ref, w2_ref, b2_ref,
               w3_ref, b3_ref, w4_ref, b4_ref, o_ref):
    x = x_ref[...]  # bf16 (tb, in)

    h1 = jnp.dot(x, w1_ref[...], preferred_element_type=jnp.float32) + b1_ref[...]
    h1 = _sigmoid(h1)

    h2 = jnp.dot(h1.astype(jnp.bfloat16), w2_ref[...],
                 preferred_element_type=jnp.float32) + b2_ref[...]
    h2 = _sigmoid(h2)

    h3 = jnp.dot(h2.astype(jnp.bfloat16), w3_ref[...],
                 preferred_element_type=jnp.float32) + b3_ref[...]
    h3 = jnp.maximum(h3, 0.0)

    h4 = jnp.dot(h3.astype(jnp.bfloat16), w4_ref[...],
                 preferred_element_type=jnp.float32) + b4_ref[...]
    o_ref[...] = h4.astype(o_ref.dtype)


def _round_up(n, m):
    return (n + m - 1) // m * m


def mlp_forward(x, params, *, tb_max=2048):
    """x: (B, input_dim) f32. params: w1..w4 of shape (in, out) f32, b1..b4 of shape (1, out) f32."""
    B, input_dim = x.shape
    out_dim = params["w4"].shape[1]

    # Only lane-pad the final layer when it is already wide; for tiny out_dim the
    # masked (tb, out_dim) store is far cheaper than writing zero lanes to HBM.
    if out_dim >= 64:
        out_cols = _round_up(out_dim, LANE)
        w4 = jnp.zeros((params["w4"].shape[0], out_cols), jnp.float32)
        w4 = w4.at[:, :out_dim].set(params["w4"])
        b4 = jnp.zeros((1, out_cols), jnp.float32).at[:, :out_dim].set(params["b4"])
    else:
        out_cols = out_dim
        w4, b4 = params["w4"], params["b4"]

    # Batch tiling: multiple of 16 rows (bf16 packing).  For batches larger than one
    # tile, target an even number (>= 2) of grid steps so v7x can shard them across
    # its two TensorCores.
    if B <= ROWS:
        tb = ROWS
    else:
        n_tiles = max(2, pl.cdiv(B, tb_max))
        n_tiles = _round_up(n_tiles, 2)
        tb = min(_round_up(tb_max, ROWS), _round_up(pl.cdiv(B, n_tiles), ROWS))
    b_pad = _round_up(B, tb)

    # bf16 MXU operands (weights once here, x once here -> halves x DMA).  Biases stay
    # f32 so the post-matmul elementwise path stays f32 everywhere (v5e friendly).
    xb = x.astype(jnp.bfloat16)
    if b_pad != B:
        xb = jnp.pad(xb, ((0, b_pad - B), (0, 0)))
    grid = (b_pad // tb,)

    args = (xb,
            params["w1"].astype(jnp.bfloat16), params["b1"],
            params["w2"].astype(jnp.bfloat16), params["b2"],
            params["w3"].astype(jnp.bfloat16), params["b3"],
            w4.astype(jnp.bfloat16), b4)

    # x tiled along batch; every weight/bias block index is constant so operands stay
    # VMEM-resident across grid steps.  ndim bound via default arg (no late binding).
    in_specs = [pl.BlockSpec((tb, input_dim), lambda i: (i, 0))]
    for a in args[1:]:
        in_specs.append(pl.BlockSpec(a.shape, lambda i, _nd=a.ndim: (0,) * _nd))

    flops = 2 * b_pad * (input_dim * 64 + 64 * 32 + 32 * 16 + 16 * out_cols)
    transcendentals = b_pad * (64 + 32)  # one tanh per sigmoid element
    bytes_accessed = (b_pad * input_dim * 2            # x (bf16)
                      + b_pad * out_cols * 4           # out (f32)
                      + sum(int(a.size) * a.dtype.itemsize for a in args[1:]))

    out = pl.pallas_call(
        mlp_kernel,
        out_shape=jax.ShapeDtypeStruct((b_pad, out_cols), jnp.float32),
        grid=grid,
        in_specs=in_specs,
        out_specs=pl.BlockSpec((tb, out_cols), lambda i: (i, 0)),
        compiler_params=pltpu.CompilerParams(
            dimension_semantics=("parallel",),   # shard batch tiles across TCs (v7x)
            vmem_limit_bytes=32 * 1024 * 1024,   # safe on v5e/v6e/v7x at tb<=2048
        ),
        cost_estimate=pl.CostEstimate(
            flops=flops,
            transcendentals=transcendentals,
            bytes_accessed=bytes_accessed,
        ),
    )(*args)
    return out[:B, :out_dim]


def init_params(key, input_dim, output_dim):
    """Deterministic init mirroring nn.Linear's default U(-1/sqrt(fan_in), +1/sqrt(fan_in))."""
    dims = [(input_dim, 64), (64, 32), (32, 16), (16, output_dim)]
    params = {}
    for i, (fan_in, fan_out) in enumerate(dims, start=1):
        key, kw, kb = jax.random.split(key, 3)
        bound = 1.0 / jnp.sqrt(float(fan_in))
        params[f"w{i}"] = jax.random.uniform(
            kw, (fan_in, fan_out), jnp.float32, -bound, bound)
        params[f"b{i}"] = jax.random.uniform(
            kb, (1, fan_out), jnp.float32, -bound, bound)
    return params


def reference_forward(x, params):
    h = jax.nn.sigmoid(x @ params["w1"] + params["b1"])
    h = jax.nn.sigmoid(h @ params["w2"] + params["b2"])
    h = jnp.maximum(h @ params["w3"] + params["b3"], 0.0)
    return h @ params["w4"] + params["b4"]


if __name__ == "__main__":
    input_dim = 8   # diabetes-style tabular features
    output_dim = 1

    key = jax.random.PRNGKey(0)
    key, kx1, kx2 = jax.random.split(key, 3)
    params = init_params(key, input_dim, output_dim)

    # Tolerances account for the bf16 MXU operands (f32 accumulation, f32 elementwise).
    ATOL = 2e-2
    RTOL = 2e-2

    # Case 1: tiny batch (single grid tile, padded to 16 rows).
    x_small = jax.random.normal(kx1, (8, input_dim), jnp.float32)
    out_small = jax.block_until_ready(mlp_forward(x_small, params))
    ref_small = reference_forward(x_small, params)
    assert out_small.shape == (8, output_dim)
    assert jnp.allclose(out_small, ref_small, atol=ATOL, rtol=RTOL), "mismatch (small)"

    # Case 2: ragged batch exercising padding + a multi-tile (even) parallel grid.
    x_big = jax.random.normal(kx2, (200, input_dim), jnp.float32)
    out_big = jax.block_until_ready(mlp_forward(x_big, params, tb_max=64))
    ref_big = reference_forward(x_big, params)
    assert out_big.shape == (200, output_dim)
    assert jnp.allclose(out_big, ref_big, atol=ATOL, rtol=RTOL), "mismatch (big)"

    print("KERNEL_OK")
</pallas_src>

<mosaic_0001>
module attributes {stable_mosaic.version = 11 : i64} {
  func.func @mlp_kernel(%arg0: i32, %arg1: memref<16x8xbf16, #tpu.memory_space<vmem>>, %arg2: memref<8x64xbf16, #tpu.memory_space<vmem>>, %arg3: memref<1x64xf32, #tpu.memory_space<vmem>>, %arg4: memref<64x32xbf16, #tpu.memory_space<vmem>>, %arg5: memref<1x32xf32, #tpu.memory_space<vmem>>, %arg6: memref<32x16xbf16, #tpu.memory_space<vmem>>, %arg7: memref<1x16xf32, #tpu.memory_space<vmem>>, %arg8: memref<16x1xbf16, #tpu.memory_space<vmem>>, %arg9: memref<1x1xf32, #tpu.memory_space<vmem>>, %arg10: memref<16x1xf32, #tpu.memory_space<vmem>>) attributes {dimension_semantics = [#tpu.dimension_semantics<parallel>], iteration_bounds = array<i64: 1>, scalar_prefetch = 0 : i64, scratch_operands = 0 : i64, tpu.core_type = #tpu.core_type<tc>, window_params = [{transform_indices = @transform_0, window_bounds = array<i64: 16, 8>}, {pipeline_mode = #tpu.pipeline_mode<synchronous>, transform_indices = @transform_1, window_bounds = array<i64: 8, 64>}, {pipeline_mode = #tpu.pipeline_mode<synchronous>, transform_indices = @transform_2, window_bounds = array<i64: 1, 64>}, {pipeline_mode = #tpu.pipeline_mode<synchronous>, transform_indices = @transform_3, window_bounds = array<i64: 64, 32>}, {pipeline_mode = #tpu.pipeline_mode<synchronous>, transform_indices = @transform_4, window_bounds = array<i64: 1, 32>}, {pipeline_mode = #tpu.pipeline_mode<synchronous>, transform_indices = @transform_5, window_bounds = array<i64: 32, 16>}, {pipeline_mode = #tpu.pipeline_mode<synchronous>, transform_indices = @transform_6, window_bounds = array<i64: 1, 16>}, {pipeline_mode = #tpu.pipeline_mode<synchronous>, transform_indices = @transform_7, window_bounds = array<i64: 16, 1>}, {pipeline_mode = #tpu.pipeline_mode<synchronous>, transform_indices = @transform_8, window_bounds = array<i64: 1, 1>}, {transform_indices = @transform_9, window_bounds = array<i64: 16, 1>}]} {
    %c0 = arith.constant 0 : index
    %c0_0 = arith.constant 0 : index
    %0 = vector.load %arg1[%c0, %c0_0] : memref<16x8xbf16, #tpu.memory_space<vmem>>, vector<16x8xbf16>
    %c0_1 = arith.constant 0 : index
    %c0_2 = arith.constant 0 : index
    %1 = vector.load %arg2[%c0_1, %c0_2] : memref<8x64xbf16, #tpu.memory_space<vmem>>, vector<8x64xbf16>
    %cst = arith.constant dense<0.000000e+00> : vector<16x64xf32>
    %2 = tpu.matmul %0, %1, %cst {dimension_numbers = #tpu.dot_dimension_numbers<[1], [0], [0], [1], [0, 0, 1, 1], [], []>} : vector<16x8xbf16>, vector<8x64xbf16>, vector<16x64xf32> -> vector<16x64xf32>
    %c0_3 = arith.constant 0 : index
    %c0_4 = arith.constant 0 : index
    %3 = vector.load %arg3[%c0_3, %c0_4] : memref<1x64xf32, #tpu.memory_space<vmem>>, vector<1x64xf32>
    %4 = vector.broadcast %3 : vector<1x64xf32> to vector<16x64xf32>
    %5 = arith.addf %2, %4 : vector<16x64xf32>
    %cst_5 = arith.constant 5.000000e-01 : f32
    %6 = vector.broadcast %cst_5 : f32 to vector<16x64xf32>
    %7 = arith.mulf %6, %5 : vector<16x64xf32>
    %8 = math.tanh %7 : vector<16x64xf32>
    %cst_6 = arith.constant 5.000000e-01 : f32
    %9 = vector.broadcast %cst_6 : f32 to vector<16x64xf32>
    %10 = arith.mulf %9, %8 : vector<16x64xf32>
    %cst_7 = arith.constant 5.000000e-01 : f32
    %11 = vector.broadcast %cst_7 : f32 to vector<16x64xf32>
    %12 = arith.addf %10, %11 : vector<16x64xf32>
    %13 = arith.truncf %12 : vector<16x64xf32> to vector<16x64xbf16>
    %c0_8 = arith.constant 0 : index
    %c0_9 = arith.constant 0 : index
    %14 = vector.load %arg4[%c0_8, %c0_9] : memref<64x32xbf16, #tpu.memory_space<vmem>>, vector<64x32xbf16>
    %cst_10 = arith.constant dense<0.000000e+00> : vector<16x32xf32>
    %15 = tpu.matmul %13, %14, %cst_10 {dimension_numbers = #tpu.dot_dimension_numbers<[1], [0], [0], [1], [0, 0, 1, 1], [], []>} : vector<16x64xbf16>, vector<64x32xbf16>, vector<16x32xf32> -> vector<16x32xf32>
    %c0_11 = arith.constant 0 : index
    %c0_12 = arith.constant 0 : index
    %16 = vector.load %arg5[%c0_11, %c0_12] : memref<1x32xf32, #tpu.memory_space<vmem>>, vector<1x32xf32>
    %17 = vector.broadcast %16 : vector<1x32xf32> to vector<16x32xf32>
    %18 = arith.addf %15, %17 : vector<16x32xf32>
    %cst_13 = arith.constant 5.000000e-01 : f32
    %19 = vector.broadcast %cst_13 : f32 to vector<16x32xf32>
    %20 = arith.mulf %19, %18 : vector<16x32xf32>
    %21 = math.tanh %20 : vector<16x32xf32>
    %cst_14 = arith.constant 5.000000e-01 : f32
    %22 = vector.broadcast %cst_14 : f32 to vector<16x32xf32>
    %23 = arith.mulf %22, %21 : vector<16x32xf32>
    %cst_15 = arith.constant 5.000000e-01 : f32
    %24 = vector.broadcast %cst_15 : f32 to vector<16x32xf32>
    %25 = arith.addf %23, %24 : vector<16x32xf32>
    %26 = arith.truncf %25 : vector<16x32xf32> to vector<16x32xbf16>
    %c0_16 = arith.constant 0 : index
    %c0_17 = arith.constant 0 : index
    %27 = vector.load %arg6[%c0_16, %c0_17] : memref<32x16xbf16, #tpu.memory_space<vmem>>, vector<32x16xbf16>
    %cst_18 = arith.constant dense<0.000000e+00> : vector<16x16xf32>
    %28 = tpu.matmul %26, %27, %cst_18 {dimension_numbers = #tpu.dot_dimension_numbers<[1], [0], [0], [1], [0, 0, 1, 1], [], []>} : vector<16x32xbf16>, vector<32x16xbf16>, vector<16x16xf32> -> vector<16x16xf32>
    %c0_19 = arith.constant 0 : index
    %c0_20 = arith.constant 0 : index
    %29 = vector.load %arg7[%c0_19, %c0_20] : memref<1x16xf32, #tpu.memory_space<vmem>>, vector<1x16xf32>
    %30 = vector.broadcast %29 : vector<1x16xf32> to vector<16x16xf32>
    %31 = arith.addf %28, %30 : vector<16x16xf32>
    %cst_21 = arith.constant 0.000000e+00 : f32
    %32 = vector.broadcast %cst_21 : f32 to vector<16x16xf32>
    %33 = arith.maximumf %31, %32 : vector<16x16xf32>
    %34 = arith.truncf %33 : vector<16x16xf32> to vector<16x16xbf16>
    %c0_22 = arith.constant 0 : index
    %c0_23 = arith.constant 0 : index
    %35 = vector.load %arg8[%c0_22, %c0_23] : memref<16x1xbf16, #tpu.memory_space<vmem>>, vector<16x1xbf16>
    %cst_24 = arith.constant dense<0.000000e+00> : vector<16x1xf32>
    %36 = tpu.matmul %34, %35, %cst_24 {dimension_numbers = #tpu.dot_dimension_numbers<[1], [0], [0], [1], [0, 0, 1, 1], [], []>} : vector<16x16xbf16>, vector<16x1xbf16>, vector<16x1xf32> -> vector<16x1xf32>
    %c0_25 = arith.constant 0 : index
    %c0_26 = arith.constant 0 : index
    %37 = vector.load %arg9[%c0_25, %c0_26] : memref<1x1xf32, #tpu.memory_space<vmem>>, vector<1x1xf32>
    %38 = vector.broadcast %37 : vector<1x1xf32> to vector<16x1xf32>
    %39 = arith.addf %36, %38 : vector<16x1xf32>
    %c0_27 = arith.constant 0 : index
    %c0_28 = arith.constant 0 : index
    %40 = vector.load %arg10[%c0_27, %c0_28] : memref<16x1xf32, #tpu.memory_space<vmem>>, vector<16x1xf32>
    tpu.vector_store %arg10[%c0_27, %c0_28], %39 {strides = array<i32>} : memref<16x1xf32, #tpu.memory_space<vmem>>, vector<16x1xf32>,
    return
  }
  func.func @transform_0(%arg0: i32) -> (i32, i32) {
    %c0_i32 = arith.constant 0 : i32
    %c0_i32_0 = arith.constant 0 : i32
    return %arg0, %c0_i32 : i32, i32
  }
  func.func @transform_1(%arg0: i32) -> (i32, i32) {
    %c0_i32 = arith.constant 0 : i32
    %c0_i32_0 = arith.constant 0 : i32
    %c0_i32_1 = arith.constant 0 : i32
    return %c0_i32, %c0_i32_0 : i32, i32
  }
  func.func @transform_2(%arg0: i32) -> (i32, i32) {
    %c0_i32 = arith.constant 0 : i32
    %c0_i32_0 = arith.constant 0 : i32
    %c0_i32_1 = arith.constant 0 : i32
    return %c0_i32, %c0_i32_0 : i32, i32
  }
  func.func @transform_3(%arg0: i32) -> (i32, i32) {
    %c0_i32 = arith.constant 0 : i32
    %c0_i32_0 = arith.constant 0 : i32
    %c0_i32_1 = arith.constant 0 : i32
    return %c0_i32, %c0_i32_0 : i32, i32
  }
  func.func @transform_4(%arg0: i32) -> (i32, i32) {
    %c0_i32 = arith.constant 0 : i32
    %c0_i32_0 = arith.constant 0 : i32
    %c0_i32_1 = arith.constant 0 : i32
    return %c0_i32, %c0_i32_0 : i32, i32
  }
  func.func @transform_5(%arg0: i32) -> (i32, i32) {
    %c0_i32 = arith.constant 0 : i32
    %c0_i32_0 = arith.constant 0 : i32
    %c0_i32_1 = arith.constant 0 : i32
    return %c0_i32, %c0_i32_0 : i32, i32
  }
  func.func @transform_6(%arg0: i32) -> (i32, i32) {
    %c0_i32 = arith.constant 0 : i32
    %c0_i32_0 = arith.constant 0 : i32
    %c0_i32_1 = arith.constant 0 : i32
    return %c0_i32, %c0_i32_0 : i32, i32
  }
  func.func @transform_7(%arg0: i32) -> (i32, i32) {
    %c0_i32 = arith.constant 0 : i32
    %c0_i32_0 = arith.constant 0 : i32
    %c0_i32_1 = arith.constant 0 : i32
    return %c0_i32, %c0_i32_0 : i32, i32
  }
  func.func @transform_8(%arg0: i32) -> (i32, i32) {
    %c0_i32 = arith.constant 0 : i32
    %c0_i32_0 = arith.constant 0 : i32
    %c0_i32_1 = arith.constant 0 : i32
    return %c0_i32, %c0_i32_0 : i32, i32
  }
  func.func @transform_9(%arg0: i32) -> (i32, i32) {
    %c0_i32 = arith.constant 0 : i32
    %c0_i32_0 = arith.constant 0 : i32
    return %arg0, %c0_i32 : i32, i32
  }
}

</mosaic_0001>

<llo_original>
// kernel: tpu_custom_call.1
$region0: #{tpu_custom_call.1}
  #allocation0 [shape = 'u32[]', space=smem, size = 0x4, offset = 0x4, fixed_abs, tag = 'smem constant byte address 0x4 - core index']
  #allocation1 [shape = 'u32[72,128]{1,0:T(1,128)}', space=vmem, size = 0x9000, scoped, tag = 'internal scratch']
  #allocation2 [shape = 'f32[1,1]{1,0:T(1,128)S(1)}', space=vmem, size = 0x200, scoped, tag = 'scoped memory for tpu_custom_call.1']
  %s0 = inlined_call_operand.vmem [shape: bf16[16,8], index: 0, kind: input, shape index: {}]
  %s1 = inlined_call_operand.vmem [shape: bf16[8,64], index: 1, kind: input, shape index: {}]
  %s2 = inlined_call_operand.vmem [shape: f32[1,64], index: 2, kind: input, shape index: {}]
  %s3 = inlined_call_operand.vmem [shape: bf16[64,32], index: 3, kind: input, shape index: {}]
  %s4 = inlined_call_operand.vmem [shape: f32[1,32], index: 4, kind: input, shape index: {}]
  %s5 = inlined_call_operand.vmem [shape: bf16[32,16], index: 5, kind: input, shape index: {}]
  %s6 = inlined_call_operand.vmem [shape: f32[1,16], index: 6, kind: input, shape index: {}]
  %s7 = inlined_call_operand.vmem [shape: bf16[16,1], index: 7, kind: input, shape index: {}]
  %s8 = inlined_call_operand.<no memory space> [shape: f32[1,1], index: 8, kind: input, shape index: {}]
  %s9 = inlined_call_operand.vmem [shape: f32[16,1], index: 9, kind: output, shape index: {}]
  %s10 = sld [smem:[#allocation0]]
  $region46: #{tpu_custom_call.1} parent=0
    _
  %s12 = ssub.s32 1, %s10
  %s13 = scalar_select 0, %s12, %s10
  %v14 = vstv %s8
  %15 = vst [vmem:[#allocation2] sm:$0x1] %v14
  // Predicated region
  $region2: #{tpu_custom_call.1} parent=0 // pred_check
    _
  $region3: #{tpu_custom_call.1} parent=0 // pred_check_branch
    %17 = sbr.rel (0) target = $region5
  $region4: #{tpu_custom_call.1} parent=0 // pred_region
    _
  $region5: #{tpu_custom_call.1} parent=0 // pred_fallthru
    _
  // Predicated region
  $region6: #{tpu_custom_call.1} parent=0 // pred_check
    _
  $region7: #{tpu_custom_call.1} parent=0 // pred_check_branch
    %19 = sbr.rel (0) target = $region9
  $region8: #{tpu_custom_call.1} parent=0 // pred_region
    _
  $region9: #{tpu_custom_call.1} parent=0 // pred_fallthru
    _
  // Predicated region
  $region10: #{tpu_custom_call.1} parent=0 // pred_check
    _
  $region11: #{tpu_custom_call.1} parent=0 // pred_check_branch
    %21 = sbr.rel (0) target = $region13
  $region12: #{tpu_custom_call.1} parent=0 // pred_region
    _
  $region13: #{tpu_custom_call.1} parent=0 // pred_fallthru
    _
  // Predicated region
  $region14: #{tpu_custom_call.1} parent=0 // pred_check
    _
  $region15: #{tpu_custom_call.1} parent=0 // pred_check_branch
    %23 = sbr.rel (0) target = $region17
  $region16: #{tpu_custom_call.1} parent=0 // pred_region
    _
  $region17: #{tpu_custom_call.1} parent=0 // pred_fallthru
    _
  // Predicated region
  $region18: #{tpu_custom_call.1} parent=0 // pred_check
    _
  $region19: #{tpu_custom_call.1} parent=0 // pred_check_branch
    %25 = sbr.rel (0) target = $region21
  $region20: #{tpu_custom_call.1} parent=0 // pred_region
    _
  $region21: #{tpu_custom_call.1} parent=0 // pred_fallthru
    _
  // Predicated region
  $region22: #{tpu_custom_call.1} parent=0 // pred_check
    _
  $region23: #{tpu_custom_call.1} parent=0 // pred_check_branch
    %27 = sbr.rel (0) target = $region25
  $region24: #{tpu_custom_call.1} parent=0 // pred_region
    _
  $region25: #{tpu_custom_call.1} parent=0 // pred_fallthru
    _
  // Predicated region
  $region26: #{tpu_custom_call.1} parent=0 // pred_check
    _
  $region27: #{tpu_custom_call.1} parent=0 // pred_check_branch
    %29 = sbr.rel (0) target = $region29
  $region28: #{tpu_custom_call.1} parent=0 // pred_region
    _
  $region29: #{tpu_custom_call.1} parent=0 // pred_fallthru
    _
  // Predicated region
  $region30: #{tpu_custom_call.1} parent=0 // pred_check
    _
  $region31: #{tpu_custom_call.1} parent=0 // pred_check_branch
    %31 = sbr.rel (0) target = $region33
  $region32: #{tpu_custom_call.1} parent=0 // pred_region
    _
  $region33: #{tpu_custom_call.1} parent=0 // pred_fallthru
    _
  // Predicated region
  $region34: #{tpu_custom_call.1} parent=0 // pred_check
    _
  $region35: #{tpu_custom_call.1} parent=0 // pred_check_branch
    %33 = sbr.rel (0) target = $region37
  $region36: #{tpu_custom_call.1} parent=0 // pred_region
    _
  $region37: #{tpu_custom_call.1} parent=0 // pred_fallthru
    _
  %v35 = vld [vmem:[%s0] sm:$0xf]
  %v36 = vld [vmem:[%s0 + $0x4] sm:$0xf]
  %v37 = vld [vmem:[%s1] sm:$0xf]
  %v38 = vld [vmem:[%s2] sm:$0x1]
  %v40 = vperm.slane %v38, 0
  %v44 = vunpack.c.l.b16 %v35
  %v45 = vunpack.c.l.b16 %v36
  %v46 = vpack.c.b16 %v45, %v44
  %vm47 = vcmask 64512
  %v49 = vsel %vm47, %v46, 0
  %vm51 = vcmask 1043456
  %v53 = vsel %vm51, %v37, 0
  %55 = vmatpush.bf16.msra.mxu0 0
  %56 = vmatpush.bf16.msra.mxu0 0
  %57 = vmatpush.bf16.msra.mxu0 0
  %58 = vmatpush.bf16.msra.mxu0 0
  %59 = vmatpush.bf16.msra.mxu0 0
  %60 = vmatpush.bf16.msra.mxu0 0
  %61 = vmatpush.bf16.msra.mxu0 0
  %62 = vmatpush.bf16.msra.mxu0 %v53
  %63 = vmatmul.bf16.gmra.mxu0 %v49
  %v64 = vpop.f32.mrf.mxu0
  %v65 = vadd.f32 %v40, %v64
  %v66 = vpop.f32.mrf.mxu0
  %v67 = vadd.f32 %v40, %v66
  %68 = vdwg.mxu0
  %v69 = vmul.f32 %v65, 0.5
  %v70 = vmul.f32 %v67, 0.5
  %v71 = vtanh.pop %v69
  %v72 = vtanh.pop %v70
  %v73 = vmul.f32 %v71, 0.5
  %v74 = vmul.f32 %v72, 0.5
  %v75 = vadd.f32 %v73, 0.5
  %v76 = vadd.f32 %v74, 0.5
  %v77 = vpack.c.bf16 %v76, %v75
  %v78 = vld [vmem:[%s3] sm:$0xf]
  %v79 = vld [vmem:[%s3 + $0x4] sm:$0xf]
  %v80 = vld [vmem:[%s3 + $0x8] sm:$0xf]
  %v81 = vld [vmem:[%s3 + $0xc] sm:$0xf]
  %v82 = vld [vmem:[%s3 + $0x10] sm:$0xf]
  %v83 = vld [vmem:[%s3 + $0x14] sm:$0xf]
  %v84 = vld [vmem:[%s3 + $0x18] sm:$0xf]
  %v85 = vld [vmem:[%s3 + $0x1c] sm:$0xf]
  %v86 = vld [vmem:[%s4] sm:$0x1]
  %v88 = vperm.slane %v86, 0
  %v98 = vunpack.c.l.b16 %v78
  %v99 = vunpack.c.l.b16 %v79
  %v100 = vunpack.c.l.b16 %v80
  %v101 = vunpack.c.l.b16 %v81
  %v102 = vunpack.c.l.b16 %v82
  %v103 = vunpack.c.l.b16 %v83
  %v104 = vunpack.c.l.b16 %v84
  %v105 = vunpack.c.l.b16 %v85
  %v106 = vpack.c.b16 %v99, %v98
  %v107 = vpack.c.b16 %v101, %v100
  %v108 = vpack.c.b16 %v103, %v102
  %v109 = vpack.c.b16 %v105, %v104
  %vm114 = vcmask 523264
  %v116 = vsel %vm114, %v77, 0
  %118 = vmatpush.bf16.msra.mxu0 0
  %119 = vmatpush.bf16.msra.mxu0 0
  %120 = vmatpush.bf16.msra.mxu0 0
  %121 = vmatpush.bf16.msra.mxu0 0
  %122 = vmatpush.bf16.msra.mxu0 %v109
  %123 = vmatpush.bf16.msra.mxu0 %v108
  %124 = vmatpush.bf16.msra.mxu0 %v107
  %125 = vmatpush.bf16.msra.mxu0 %v106
  %126 = vmatmul.bf16.gmra.mxu0 %v116
  %v127 = vpop.f32.mrf.mxu0
  %v128 = vadd.f32 %v88, %v127
  %v129 = vpop.f32.mrf.mxu0
  %v130 = vadd.f32 %v88, %v129
  %131 = vdwg.mxu0
  %v132 = vmul.f32 %v128, 0.5
  %v133 = vmul.f32 %v130, 0.5
  %v134 = vtanh.pop %v132
  %v135 = vtanh.pop %v133
  %v136 = vmul.f32 %v134, 0.5
  %v137 = vmul.f32 %v135, 0.5
  %v138 = vadd.f32 %v136, 0.5
  %v139 = vadd.f32 %v137, 0.5
  %v140 = vpack.c.bf16 %v139, %v138
  %v141 = vld [vmem:[%s5] sm:$0xf]
  %v142 = vld [vmem:[%s5 + $0x4] sm:$0xf]
  %v143 = vld [vmem:[%s5 + $0x8] sm:$0xf]
  %v144 = vld [vmem:[%s5 + $0xc] sm:$0xf]
  %v145 = vld [vmem:[%s6] sm:$0x1]
  %v147 = vperm.slane %v145, 0
  %v153 = vunpack.c.l.b16 %v141
  %v154 = vunpack.c.l.b16 %v142
  %v155 = vunpack.c.l.b16 %v143
  %v156 = vunpack.c.l.b16 %v144
  %v157 = vpack.c.b16 %v154, %v153
  %v158 = vpack.c.b16 %v156, %v155
  %vm161 = vcmask 261120
  %v163 = vsel %vm161, %v140, 0
  %165 = vmatpush.bf16.msra.mxu0 0
  %166 = vmatpush.bf16.msra.mxu0 0
  %167 = vmatpush.bf16.msra.mxu0 0
  %168 = vmatpush.bf16.msra.mxu0 0
  %169 = vmatpush.bf16.msra.mxu0 0
  %170 = vmatpush.bf16.msra.mxu0 0
  %171 = vmatpush.bf16.msra.mxu0 %v158
  %172 = vmatpush.bf16.msra.mxu0 %v157
  %173 = vmatmul.bf16.gmra.mxu0 %v163
  %v174 = vpop.f32.mrf.mxu0
  %v175 = vadd.f32 %v147, %v174
  %v176 = vpop.f32.mrf.mxu0
  %v177 = vadd.f32 %v147, %v176
  %178 = vdwg.mxu0
  %v179 = vmax.f32 %v175, 0.0
  %v180 = vmax.f32 %v177, 0.0
  %v181 = vpack.c.bf16 %v180, %v179
  %v182 = vld [vmem:[%s7] sm:$0xf]
  %v183 = vld [vmem:[%s7 + $0x4] sm:$0xf]
  %v184 = vld [vmem:[#allocation2] sm:$0x1]
  %v186 = vperm.slane %v184, 0
  %v190 = vunpack.c.l.b16 %v182
  %v191 = vunpack.c.l.b16 %v183
  %v192 = vpack.c.b16 %v191, %v190
  %vm194 = vcmask 130048
  %v196 = vsel %vm194, %v181, 0
  %198 = vmatpush.bf16.msra.mxu0 0
  %199 = vmatpush.bf16.msra.mxu0 0
  %200 = vmatpush.bf16.msra.mxu0 0
  %201 = vmatpush.bf16.msra.mxu0 0
  %202 = vmatpush.bf16.msra.mxu0 0
  %203 = vmatpush.bf16.msra.mxu0 0
  %204 = vmatpush.bf16.msra.mxu0 0
  %205 = vmatpush.bf16.msra.mxu0 %v192
  %206 = vmatmul.bf16.gmra.mxu0 %v196
  %v207 = vpop.f32.mrf.mxu0
  %v208 = vadd.f32 %v186, %v207
  %v209 = vpop.f32.mrf.mxu0
  %v210 = vadd.f32 %v186, %v209
  %211 = vdwg.mxu0
  %vm212 = vcmask 7168
  %213 = vst.msk [vmem:[%s9] sm:$0xff] %vm212, %v208
  %214 = vst.msk [vmem:[%s9 + $0x8] sm:$0xff] %vm212, %v210
  // Predicated region
  $region38: #{tpu_custom_call.1} parent=0 // pred_check
    _
  $region39: #{tpu_custom_call.1} parent=0 // pred_check_branch
    %216 = sbr.rel (0) target = $region41
  $region40: #{tpu_custom_call.1} parent=0 // pred_region
    _
  $region41: #{tpu_custom_call.1} parent=0 // pred_fallthru
    _
  // Predicated region
  $region42: #{tpu_custom_call.1} parent=0 // pred_check
    _
  $region43: #{tpu_custom_call.1} parent=0 // pred_check_branch
    %218 = sbr.rel (0) target = $region45
  $region44: #{tpu_custom_call.1} parent=0 // pred_region
    _
  $region45: #{tpu_custom_call.1} parent=0 // pred_fallthru
    _

</llo_original>
